<compile_context>
chip_gen: v6e
topology: v6e:2x2x1
jax: 0.10.0
libtpu: 0.0.40
codegen_flags: <defaults>
</compile_context>

<pallas_src>
import jax
import jax.numpy as jnp
from jax.experimental import pallas as pl
from jax.experimental.pallas import tpu as pltpu

EPS = 1e-5            # PyTorch BatchNorm default eps
LANES = 128           # vreg lane width
MAX_TILE_ROWS = 4096  # 4096 x 128 f32 = 2 MiB per streamed tile

# Per-chip VMEM capacity (v5e/v6e: 128 MiB, v7x: 64 MiB); conservative fallback.
try:
    _VMEM_CAP = int(pltpu.get_tpu_info().vmem_capacity_bytes)
except Exception:  # pragma: no cover - info query unavailable
    _VMEM_CAP = 64 * 1024 * 1024

_FAST_VMEM_BUDGET = int(_VMEM_CAP * 0.8)
_STREAM_VMEM_LIMIT = min(32 * 1024 * 1024, _FAST_VMEM_BUDGET)


# -----------------------------------------------------------------------------
# FAST PATH: single pallas_call, x resident in VMEM, stats + alpha/beta + apply.
# -----------------------------------------------------------------------------
def _make_fused_kernel(total, rows):
    full_rows, rem = divmod(total, LANES)

    def kernel(p_ref, x_ref, o_ref):
        # Promote scalar params to (1,1) vectors so every float op is a vector op.
        one = jnp.ones((1, 1), jnp.float32)

        def v(idx):
            return p_ref[idx] * one

        x = x_ref[...].astype(jnp.float32)
        n = jnp.float32(total)

        if rem == 0:
            xs = x
        else:
            r = jax.lax.broadcasted_iota(jnp.int32, x.shape, 0)
            l = jax.lax.broadcasted_iota(jnp.int32, x.shape, 1)
            valid = (r < full_rows) | ((r == full_rows) & (l < rem))
            xs = jnp.where(valid, x, 0.0)

        s = jnp.sum(jnp.sum(xs, axis=0, keepdims=True), axis=1, keepdims=True)
        mean = s / n                                   # (1,1)
        xc = x - mean
        if rem != 0:
            xc = jnp.where(valid, xc, 0.0)
        var = jnp.sum(jnp.sum(xc * xc, axis=0, keepdims=True),
                      axis=1, keepdims=True) / n       # (1,1), exact two-pass

        # params layout: [w1,b1,w2,b2,g1,be1,w3,b3,w4,b4,g2,be2]
        A = v(0) * v(2)                                # conv1*conv2 weight
        bn1 = v(4) * A * jax.lax.rsqrt(A * A * var + EPS)
        C = v(6) * v(8)                                # conv3*conv4 weight
        cs1 = C * bn1
        alpha = v(10) * cs1 * jax.lax.rsqrt(cs1 * cs1 * var + EPS)
        beta = v(11) - alpha * mean

        o_ref[...] = (alpha * x + beta).astype(o_ref.dtype)

    return kernel


# -----------------------------------------------------------------------------
# STREAMING pass 1: tiled centered sum / sum-of-squares with VMEM accumulators.
# Output stats (3, 128): row 0 = pilot (broadcast), row 1 = per-lane centered
# sums, row 2 = per-lane centered sums of squares (final 128-wide reduce in XLA).
# -----------------------------------------------------------------------------
def _make_stats_kernel(total, rows, tile_rows, num_tiles):
    full_rows, rem = divmod(total, LANES)
    needs_mask = (rem != 0) or (num_tiles * tile_rows != rows)

    def kernel(x_ref, stats_ref, acc_s, acc_q, pilot_ref):
        i = pl.program_id(0)

        @pl.when(i == 0)
        def _():
            pilot_ref[...] = x_ref[0:1, 0:1].astype(jnp.float32)
            acc_s[...] = jnp.zeros_like(acc_s)
            acc_q[...] = jnp.zeros_like(acc_q)

        x = x_ref[...].astype(jnp.float32)
        xc = x - pilot_ref[...]                        # pilot-centered (cancellation-safe)
        if needs_mask:
            r = jax.lax.broadcasted_iota(jnp.int32, x.shape, 0) + i * tile_rows
            if rem == 0:
                valid = r < full_rows
            else:
                l = jax.lax.broadcasted_iota(jnp.int32, x.shape, 1)
                valid = (r < full_rows) | ((r == full_rows) & (l < rem))
            xc = jnp.where(valid, xc, 0.0)

        acc_s[...] = acc_s[...] + xc                   # pure VPU per step
        acc_q[...] = acc_q[...] + xc * xc

        @pl.when(i == num_tiles - 1)
        def _():
            stats_ref[0:1, :] = jnp.broadcast_to(pilot_ref[...], (1, LANES))
            stats_ref[1:2, :] = jnp.sum(acc_s[...], axis=0, keepdims=True)
            stats_ref[2:3, :] = jnp.sum(acc_q[...], axis=0, keepdims=True)

    return kernel


# -----------------------------------------------------------------------------
# STREAMING pass 2: tiled elementwise y = alpha*x + beta (alpha/beta prefetched).
# -----------------------------------------------------------------------------
def _apply_kernel(ab_ref, x_ref, o_ref):
    alpha = ab_ref[0]
    beta = ab_ref[1]
    o_ref[...] = (alpha * x_ref[...].astype(jnp.float32) + beta).astype(o_ref.dtype)


def model_forward(x, params, *, force_two_pass=False):
    """x: (N, C=1, D, H, W) float32; params: f32[12] =
    [w1, b1, w2, b2, g1, be1, w3, b3, w4, b4, g2, be2]."""
    orig_shape = x.shape
    orig_dtype = x.dtype
    total = int(x.size)
    rows = -(-total // LANES)
    rem = total % LANES

    # Lane-dense (rows, 128) slab.  No copies when total is lane-aligned.
    x_flat = x.reshape(-1)
    if rem != 0:
        x_flat = jnp.pad(x_flat, (0, rows * LANES - total))
    x2d = x_flat.reshape(rows, LANES)

    p = params.astype(jnp.float32)
    slab_bytes = rows * LANES * 4
    use_fast = (not force_two_pass) and (6 * slab_bytes + (2 << 20) <= _FAST_VMEM_BUDGET)

    if use_fast:
        # -------- single fused kernel, x resident in VMEM (2N HBM traffic) --------
        out2d = pl.pallas_call(
            _make_fused_kernel(total, rows),
            out_shape=jax.ShapeDtypeStruct((rows, LANES), orig_dtype),
            grid_spec=pltpu.PrefetchScalarGridSpec(
                num_scalar_prefetch=1,
                grid=(1,),
                in_specs=[pl.BlockSpec((rows, LANES), lambda i, _p: (0, 0))],
                out_specs=pl.BlockSpec((rows, LANES), lambda i, _p: (0, 0)),
            ),
            compiler_params=pltpu.CompilerParams(
                dimension_semantics=("arbitrary",),
                vmem_limit_bytes=_FAST_VMEM_BUDGET),
        )(p, x2d)
    else:
        # -------- streaming two-pass path (3N HBM traffic) --------
        if rows <= MAX_TILE_ROWS:
            tile_rows, num_tiles = rows, 1
        else:
            tile_rows = MAX_TILE_ROWS
            num_tiles = pl.cdiv(rows, MAX_TILE_ROWS)

        stats = pl.pallas_call(
            _make_stats_kernel(total, rows, tile_rows, num_tiles),
            out_shape=jax.ShapeDtypeStruct((3, LANES), jnp.float32),
            grid=(num_tiles,),
            in_specs=[pl.BlockSpec((tile_rows, LANES), lambda i: (i, 0))],
            out_specs=pl.BlockSpec((3, LANES), lambda i: (0, 0)),
            scratch_shapes=[pltpu.VMEM((tile_rows, LANES), jnp.float32),
                            pltpu.VMEM((tile_rows, LANES), jnp.float32),
                            pltpu.VMEM((1, 1), jnp.float32)],
            compiler_params=pltpu.CompilerParams(
                dimension_semantics=("arbitrary",),
                vmem_limit_bytes=_STREAM_VMEM_LIMIT),
        )(x2d)

        # Closed-form alpha/beta (tiny scalar XLA graph, computed once).
        pilot = stats[0, 0]
        sum_c = jnp.sum(stats[1])
        sq_c = jnp.sum(stats[2])
        n = jnp.float32(total)
        mean_x = pilot + sum_c / n
        var_x = jnp.maximum(sq_c / n - (sum_c / n) ** 2, 0.0)

        w1, w2, g1 = p[0], p[2], p[4]
        w3, w4, g2, be2 = p[6], p[8], p[10], p[11]
        A = w1 * w2
        bn1 = g1 * A * jax.lax.rsqrt(A * A * var_x + EPS)
        C = w3 * w4
        cs1 = C * bn1
        alpha = g2 * cs1 * jax.lax.rsqrt(cs1 * cs1 * var_x + EPS)
        beta = be2 - alpha * mean_x
        ab = jnp.stack([alpha, beta]).astype(jnp.float32)

        out2d = pl.pallas_call(
            _apply_kernel,
            out_shape=jax.ShapeDtypeStruct((rows, LANES), orig_dtype),
            grid_spec=pltpu.PrefetchScalarGridSpec(
                num_scalar_prefetch=1,
                grid=(num_tiles,),
                in_specs=[pl.BlockSpec((tile_rows, LANES), lambda i, _ab: (i, 0))],
                out_specs=pl.BlockSpec((tile_rows, LANES), lambda i, _ab: (i, 0)),
            ),
            compiler_params=pltpu.CompilerParams(
                dimension_semantics=("parallel",),
                vmem_limit_bytes=_STREAM_VMEM_LIMIT),
        )(ab, x2d)

    out_flat = out2d.reshape(-1)
    if rem != 0:
        out_flat = out_flat[:total]
    return out_flat.reshape(orig_shape)


def reference_forward(x, params):
    """Pure-JAX reference matching the original PyTorch forward (training-mode BN)."""
    p = params.astype(jnp.float32)
    w1, b1, w2, b2, g1, be1, w3, b3, w4, b4, g2, be2 = (p[i] for i in range(12))
    h = w2 * (w1 * x + b1) + b2
    m = jnp.mean(h)
    v = jnp.mean((h - m) ** 2)
    h = (h - m) * jax.lax.rsqrt(v + EPS) * g1 + be1
    h = w4 * (w3 * h + b3) + b4
    m2 = jnp.mean(h)
    v2 = jnp.mean((h - m2) ** 2)
    return (h - m2) * jax.lax.rsqrt(v2 + EPS) * g2 + be2


def init_params(key):
    """Deterministic stand-ins for the PyTorch parameters (fan_in=1 -> U(-1,1))."""
    ks = jax.random.split(key, 8)
    w1 = jax.random.uniform(ks[0], (), jnp.float32, -1.0, 1.0)
    b1 = jax.random.uniform(ks[1], (), jnp.float32, -1.0, 1.0)
    w2 = jax.random.uniform(ks[2], (), jnp.float32, -1.0, 1.0)
    b2 = jax.random.uniform(ks[3], (), jnp.float32, -1.0, 1.0)
    w3 = jax.random.uniform(ks[4], (), jnp.float32, -1.0, 1.0)
    b3 = jax.random.uniform(ks[5], (), jnp.float32, -1.0, 1.0)
    w4 = jax.random.uniform(ks[6], (), jnp.float32, -1.0, 1.0)
    b4 = jax.random.uniform(ks[7], (), jnp.float32, -1.0, 1.0)
    g1, be1 = jnp.float32(1.0), jnp.float32(0.0)   # BatchNorm2d affine defaults
    g2, be2 = jnp.float32(1.0), jnp.float32(0.0)   # BatchNorm3d affine defaults
    return jnp.stack([w1, b1, w2, b2, g1, be1, w3, b3, w4, b4, g2, be2]).astype(
        jnp.float32
    )


if __name__ == "__main__":
    key = jax.random.PRNGKey(0)
    k_x, k_p = jax.random.split(key)
    params = init_params(k_p)

    # 1) Primary small test (lane-aligned -> zero-copy fused fast path).
    x = jax.random.normal(k_x, (2, 1, 4, 8, 16), dtype=jnp.float32)
    y = model_forward(x, params)
    jax.block_until_ready(y)
    assert y.shape == x.shape and y.dtype == x.dtype
    y_ref = reference_forward(x, params)
    err = float(jnp.max(jnp.abs(y - y_ref)))
    assert err < 2e-3, f"fast-path (aligned) mismatch: {err}"

    # 2) Unaligned small test (exercises the in-kernel tail mask, fast path).
    x2 = jax.random.normal(jax.random.PRNGKey(1), (1, 1, 3, 5, 7), dtype=jnp.float32)
    y2 = model_forward(x2, params)
    jax.block_until_ready(y2)
    err2 = float(jnp.max(jnp.abs(y2 - reference_forward(x2, params))))
    assert err2 < 2e-3, f"fast-path (ragged) mismatch: {err2}"

    # 3) Streaming two-pass path (forced): multi-tile grid, partial last block,
    #    pilot-centered stats accumulators, scalar-prefetched apply pass.
    x3 = jax.random.normal(jax.random.PRNGKey(2), (1, 1, 13, 211, 210),
                           dtype=jnp.float32)
    y3 = model_forward(x3, params, force_two_pass=True)
    jax.block_until_ready(y3)
    err3 = float(jnp.max(jnp.abs(y3 - reference_forward(x3, params))))
    assert err3 < 2e-3, f"two-pass path mismatch: {err3}"

    print("KERNEL_OK")
</pallas_src>

<mosaic_0001>
module attributes {stable_mosaic.version = 11 : i64} {
  func.func @kernel(%arg0: i32, %arg1: memref<12xf32, #tpu.memory_space<smem>>, %arg2: memref<8x128xf32, #tpu.memory_space<vmem>>, %arg3: memref<8x128xf32, #tpu.memory_space<vmem>>) attributes {dimension_semantics = [#tpu.dimension_semantics<arbitrary>], iteration_bounds = array<i64: 1>, scalar_prefetch = 1 : i64, scratch_operands = 0 : i64, tpu.core_type = #tpu.core_type<tc>, window_params = [{pipeline_mode = #tpu.pipeline_mode<synchronous>, transform_indices = @transform_0, window_bounds = array<i64: 8, 128>}, {pipeline_mode = #tpu.pipeline_mode<synchronous>, transform_indices = @transform_1, window_bounds = array<i64: 8, 128>}]} {
    %cst = arith.constant 1.000000e+00 : f32
    %0 = vector.broadcast %cst : f32 to vector<1x1xf32>
    %c0 = arith.constant 0 : index
    %c0_0 = arith.constant 0 : index
    %1 = vector.load %arg2[%c0, %c0_0] : memref<8x128xf32, #tpu.memory_space<vmem>>, vector<8x128xf32>
    %cst_1 = arith.constant dense<0.000000e+00> : vector<128xf32>
    %2 = vector.multi_reduction <add>, %1, %cst_1 [0] : vector<8x128xf32> to vector<128xf32>
    %3 = vector.shape_cast %2 : vector<128xf32> to vector<1x128xf32>
    %cst_2 = arith.constant dense<0.000000e+00> : vector<1xf32>
    %4 = vector.multi_reduction <add>, %3, %cst_2 [1] : vector<1x128xf32> to vector<1xf32>
    %5 = vector.shape_cast %4 : vector<1xf32> to vector<1x1xf32>
    %cst_3 = arith.constant 1.024000e+03 : f32
    %6 = vector.broadcast %cst_3 : f32 to vector<1x1xf32>
    %7 = arith.divf %5, %6 : vector<1x1xf32>
    %8 = vector.broadcast %7 : vector<1x1xf32> to vector<8x128xf32>
    %9 = arith.subf %1, %8 : vector<8x128xf32>
    %10 = arith.mulf %9, %9 : vector<8x128xf32>
    %cst_4 = arith.constant dense<0.000000e+00> : vector<128xf32>
    %11 = vector.multi_reduction <add>, %10, %cst_4 [0] : vector<8x128xf32> to vector<128xf32>
    %12 = vector.shape_cast %11 : vector<128xf32> to vector<1x128xf32>
    %cst_5 = arith.constant dense<0.000000e+00> : vector<1xf32>
    %13 = vector.multi_reduction <add>, %12, %cst_5 [1] : vector<1x128xf32> to vector<1xf32>
    %14 = vector.shape_cast %13 : vector<1xf32> to vector<1x1xf32>
    %cst_6 = arith.constant 1.024000e+03 : f32
    %15 = vector.broadcast %cst_6 : f32 to vector<1x1xf32>
    %16 = arith.divf %14, %15 : vector<1x1xf32>
    %c0_7 = arith.constant 0 : index
    %17 = memref.load %arg1[%c0_7] : memref<12xf32, #tpu.memory_space<smem>>
    %18 = vector.broadcast %17 : f32 to vector<1x1xf32>
    %19 = arith.mulf %18, %0 : vector<1x1xf32>
    %c2 = arith.constant 2 : index
    %20 = memref.load %arg1[%c2] : memref<12xf32, #tpu.memory_space<smem>>
    %21 = vector.broadcast %20 : f32 to vector<1x1xf32>
    %22 = arith.mulf %21, %0 : vector<1x1xf32>
    %23 = arith.mulf %19, %22 : vector<1x1xf32>
    %c4 = arith.constant 4 : index
    %24 = memref.load %arg1[%c4] : memref<12xf32, #tpu.memory_space<smem>>
    %25 = vector.broadcast %24 : f32 to vector<1x1xf32>
    %26 = arith.mulf %25, %0 : vector<1x1xf32>
    %27 = arith.mulf %26, %23 : vector<1x1xf32>
    %28 = arith.mulf %23, %23 : vector<1x1xf32>
    %29 = arith.mulf %28, %16 : vector<1x1xf32>
    %cst_8 = arith.constant 9.99999974E-6 : f32
    %30 = vector.broadcast %cst_8 : f32 to vector<1x1xf32>
    %31 = arith.addf %29, %30 : vector<1x1xf32>
    %32 = math.rsqrt %31 : vector<1x1xf32>
    %33 = arith.mulf %27, %32 : vector<1x1xf32>
    %c6 = arith.constant 6 : index
    %34 = memref.load %arg1[%c6] : memref<12xf32, #tpu.memory_space<smem>>
    %35 = vector.broadcast %34 : f32 to vector<1x1xf32>
    %36 = arith.mulf %35, %0 : vector<1x1xf32>
    %c8 = arith.constant 8 : index
    %37 = memref.load %arg1[%c8] : memref<12xf32, #tpu.memory_space<smem>>
    %38 = vector.broadcast %37 : f32 to vector<1x1xf32>
    %39 = arith.mulf %38, %0 : vector<1x1xf32>
    %40 = arith.mulf %36, %39 : vector<1x1xf32>
    %41 = arith.mulf %40, %33 : vector<1x1xf32>
    %c10 = arith.constant 10 : index
    %42 = memref.load %arg1[%c10] : memref<12xf32, #tpu.memory_space<smem>>
    %43 = vector.broadcast %42 : f32 to vector<1x1xf32>
    %44 = arith.mulf %43, %0 : vector<1x1xf32>
    %45 = arith.mulf %44, %41 : vector<1x1xf32>
    %46 = arith.mulf %41, %41 : vector<1x1xf32>
    %47 = arith.mulf %46, %16 : vector<1x1xf32>
    %cst_9 = arith.constant 9.99999974E-6 : f32
    %48 = vector.broadcast %cst_9 : f32 to vector<1x1xf32>
    %49 = arith.addf %47, %48 : vector<1x1xf32>
    %50 = math.rsqrt %49 : vector<1x1xf32>
    %51 = arith.mulf %45, %50 : vector<1x1xf32>
    %c11 = arith.constant 11 : index
    %52 = memref.load %arg1[%c11] : memref<12xf32, #tpu.memory_space<smem>>
    %53 = vector.broadcast %52 : f32 to vector<1x1xf32>
    %54 = arith.mulf %53, %0 : vector<1x1xf32>
    %55 = arith.mulf %51, %7 : vector<1x1xf32>
    %56 = arith.subf %54, %55 : vector<1x1xf32>
    %57 = vector.broadcast %51 : vector<1x1xf32> to vector<8x128xf32>
    %58 = arith.mulf %57, %1 : vector<8x128xf32>
    %59 = vector.broadcast %56 : vector<1x1xf32> to vector<8x128xf32>
    %60 = arith.addf %58, %59 : vector<8x128xf32>
    %c0_10 = arith.constant 0 : index
    %c0_11 = arith.constant 0 : index
    %61 = vector.load %arg3[%c0_10, %c0_11] : memref<8x128xf32, #tpu.memory_space<vmem>>, vector<8x128xf32>
    tpu.vector_store %arg3[%c0_10, %c0_11], %60 {strides = array<i32>} : memref<8x128xf32, #tpu.memory_space<vmem>>, vector<8x128xf32>,
    return
  }
  func.func @transform_0(%arg0: i32, %arg1: memref<12xf32, #tpu.memory_space<smem>>) -> (i32, i32) {
    %c0_i32 = arith.constant 0 : i32
    %c0_i32_0 = arith.constant 0 : i32
    %c0_i32_1 = arith.constant 0 : i32
    return %c0_i32, %c0_i32_0 : i32, i32
  }
  func.func @transform_1(%arg0: i32, %arg1: memref<12xf32, #tpu.memory_space<smem>>) -> (i32, i32) {
    %c0_i32 = arith.constant 0 : i32
    %c0_i32_0 = arith.constant 0 : i32
    %c0_i32_1 = arith.constant 0 : i32
    return %c0_i32, %c0_i32_0 : i32, i32
  }
}

</mosaic_0001>

<llo_original>
// kernel: tpu_custom_call.1
$region0: #{tpu_custom_call.1}
  #allocation0 [shape = 'u32[]', space=smem, size = 0x4, offset = 0x4, fixed_abs, tag = 'smem constant byte address 0x4 - core index']
  #allocation1 [shape = 'u32[144,128]{1,0:T(1,128)}', space=vmem, size = 0x12000, scoped, tag = 'internal scratch']
  #allocation2 [shape = 's32[1]{0}', space=sflag, size = 0x4, scoped, tag = 'scoped memory for tpu_custom_call.1']
  #allocation3 [shape = 'u8[512]{0}', space=smem, size = 0x200, scoped, tag = 'prefetched SMEM operand 0']
  %s0 = inlined_call_operand.hbm [shape: f32[12], index: 0, kind: input, shape index: {}]
  %s1 = inlined_call_operand.hbm [shape: f32[8,128], index: 1, kind: input, shape index: {}]
  %s2 = inlined_call_operand.hbm [shape: f32[8,128], index: 2, kind: output, shape index: {}]
  %s3 = sld [smem:[#allocation0]]
  $region18: #{tpu_custom_call.1} parent=0
    _
  %s5 = ssub.s32 1, %s3
  %s6 = scalar_select 0, %s5, %s3
  %8 = dma.hbm_to_smem %s0, 16, [#allocation3], [#allocation2]
  %9 = dma.done [#allocation2], 16
  %10 = sfence
  $region1: #{tpu_custom_call.1} parent=0
    #allocation4 [shape = 'u8[4096]{0}', space=vmem, size = 0x1000, scoped, tag = 'input window, operand 1, single buffered']
    #allocation5 [shape = 's32[1]{0}', space=sflag, size = 0x4, scoped, tag = 'scoped memory for tpu_custom_call.1']
    #allocation6 [shape = 's32[1]{0}', space=sflag, size = 0x4, scoped, tag = 'scoped memory for tpu_custom_call.1']
    #allocation7 [shape = 'u8[4096]{0}', space=vmem, size = 0x1000, scoped, tag = 'output window, operand 0, single buffered']
    %11 = vsyncpa [#allocation5], 0
    %12 = vsyncpa [#allocation6], 0
    // Predicated region
    $region2: #{tpu_custom_call.1} parent=1 // pred_check
      _
    $region3: #{tpu_custom_call.1} parent=1 // pred_check_branch
      %14 = sbr.rel (0) target = $region5
    $region4: #{tpu_custom_call.1} parent=1 // pred_region
      %s16 = ssub.s32 128, 128
      %17 = vsyncadd [#allocation5], %s16
      %s19 = sshll.u32 [#allocation4], 4
      %s20 = int_to_ptr.vmem [resolvable:$true] %s19
      %22 = dma.hbm_to_vmem [thread:$0]  %s1, 128, %s20, [#allocation5]
    $region5: #{tpu_custom_call.1} parent=1 // pred_fallthru
      _
    // Predicated region
    $region6: #{tpu_custom_call.1} parent=1 // pred_check
      _
    $region7: #{tpu_custom_call.1} parent=1 // pred_check_branch
      %24 = sbr.rel (0) target = $region9
    $region8: #{tpu_custom_call.1} parent=1 // pred_region
      %25 = dma.done [#allocation5], 128
    $region9: #{tpu_custom_call.1} parent=1 // pred_fallthru
      _
    %v26 = vld [vmem:[#allocation4] sm:$0xff]
    %v27 = vrot.slane %v26, 4
    %v28 = vadd.f32 %v26, %v27
    %v29 = vrot.slane %v28, 2
    %v30 = vadd.f32 %v28, %v29
    %v31 = vrot.slane %v30, 1
    %v32 = vadd.f32 %v30, %v31
    %33 = vadd.xlane.f32.xlu0 %v32
    %v34 = vpop.xlane.xlu0 %33
    %v35 = vrcp.pop 1024.0
    %v36 = vmul.f32 %v34, %v35
    %v37 = vsub.f32 %v26, %v36
    %v38 = vmul.f32 %v37, %v37
    %v39 = vrot.slane %v38, 4
    %v40 = vadd.f32 %v38, %v39
    %v41 = vrot.slane %v40, 2
    %v42 = vadd.f32 %v40, %v41
    %v43 = vrot.slane %v42, 1
    %v44 = vadd.f32 %v42, %v43
    %45 = vadd.xlane.f32.xlu0 %v44
    %v46 = vpop.xlane.xlu0 %45
    %v47 = vmul.f32 %v46, %v35
    %s48 = sld [smem:[#allocation3]]
    %v49 = vstv %s48
    %s50 = sld [smem:[#allocation3 + $0x2]]
    %v51 = vstv %s50
    %v52 = vmul.f32 %v49, %v51
    %s53 = sld [smem:[#allocation3 + $0x4]]
    %v54 = vstv %s53
    %v55 = vmul.f32 %v54, %v52
    %v56 = vmul.f32 %v52, %v52
    %v57 = vmul.f32 %v56, %v47
    %v58 = vadd.f32 %v57, 1e-05
    %v59 = vrsqrt.pop %v58
    %v60 = vmul.f32 %v55, %v59
    %s61 = sld [smem:[#allocation3 + $0x6]]
    %v62 = vstv %s61
    %s63 = sld [smem:[#allocation3 + $0x8]]
    %v64 = vstv %s63
    %v65 = vmul.f32 %v62, %v64
    %v66 = vmul.f32 %v65, %v60
    %s67 = sld [smem:[#allocation3 + $0xa]]
    %v68 = vstv %s67
    %v69 = vmul.f32 %v68, %v66
    %v70 = vmul.f32 %v66, %v66
    %v71 = vmul.f32 %v70, %v47
    %v72 = vadd.f32 %v71, 1e-05
    %v73 = vrsqrt.pop %v72
    %v74 = vmul.f32 %v69, %v73
    %s75 = sld [smem:[#allocation3 + $0xb]]
    %v76 = vstv %s75
    %v77 = vmul.f32 %v74, %v36
    %v78 = vsub.f32 %v76, %v77
    %v79 = vmul.f32 %v74, %v26
    %v80 = vadd.f32 %v79, %v78
    %81 = vst [vmem:[#allocation7] sm:$0xff] %v80
    // Predicated region
    $region10: #{tpu_custom_call.1} parent=1 // pred_check
      _
    $region11: #{tpu_custom_call.1} parent=1 // pred_check_branch
      %83 = sbr.rel (0) target = $region13
    $region12: #{tpu_custom_call.1} parent=1 // pred_region
      %s85 = ssub.s32 128, 128
      %86 = vsyncadd [#allocation6], %s85
      %s88 = sshll.u32 [#allocation7], 4
      %s89 = int_to_ptr.vmem [resolvable:$true] %s88
      %91 = dma.vmem_to_hbm [thread:$0]  %s89, 128, %s2, [#allocation6]
    $region13: #{tpu_custom_call.1} parent=1 // pred_fallthru
      _
    // Predicated region
    $region14: #{tpu_custom_call.1} parent=1 // pred_check
      _
    $region15: #{tpu_custom_call.1} parent=1 // pred_check_branch
      %93 = sbr.rel (0) target = $region17
    $region16: #{tpu_custom_call.1} parent=1 // pred_region
      %94 = dma.done [#allocation6], 128
    $region17: #{tpu_custom_call.1} parent=1 // pred_fallthru
      _
    %95 = vsyncpa [#allocation5], 1
    %96 = vsyncpa [#allocation6], 1

</llo_original>
